<compile_context>
chip_gen: v5e
topology: v5e:2x2
jax: 0.10.0
libtpu: 0.0.40
codegen_flags: <defaults>
</compile_context>

<pallas_src>
import functools
import math

import jax
import jax.numpy as jnp
from jax.experimental import pallas as pl
from jax.experimental.pallas import tpu as pltpu


def _round_up(a: int, b: int) -> int:
    return -(-a // b) * b


def _resolve_group(channels: int, group: int = 32) -> int:
    # Mirrors DualOctreeGroupNorm.__init__ group selection.
    if channels <= 32:
        group = channels // 4
    elif channels % group != 0:
        group = 30
    assert channels % group == 0
    return group


def _gelu_erf(x):
    # Exact (erf-based) GELU. erf via Abramowitz & Stegun 7.1.26 (|err| <= 1.5e-7),
    # using only abs/mul/exp/where + an EUP reciprocal (always lower on Mosaic).
    z = x * (1.0 / math.sqrt(2.0))
    a = jnp.abs(z)
    d = 1.0 + 0.3275911 * a
    t = pl.reciprocal(d, approx=True)       # EUP slot (otherwise idle)
    t = t * (2.0 - d * t)                   # one Newton step -> ~f32-accurate 1/d
    poly = t * (0.254829592 + t * (-0.284496736 + t * (1.421413741
                + t * (-1.453152027 + t * 1.061405429))))
    erf_a = 1.0 - poly * jnp.exp(-a * a)
    erf_z = jnp.where(z < 0.0, -erf_a, erf_a)
    return 0.5 * x * (1.0 + erf_z)


def _conv1x1_gn_gelu_kernel(x_ref, w_ref, bidc_ref, bidr_ref, gmat_ref,
                            gamma_ref, beta_ref, o_ref,
                            s1_ref, s2_ref, cnt_ref, scale_ref, shift_ref,
                            *, nbatch, cpg, eps):
    # Grid: (phase, row_tile).  phase 0 accumulates stats, phase 1 writes output.
    # x_ref:     (Tn, Cin)  bf16   node-feature row tile
    # w_ref:     (Cin, C)   bf16   pre-transposed Linear weight
    # bidc_ref:  (Tn, 1)    i32    batch id per node (column layout)
    # bidr_ref:  (1, Tn)    i32    batch id per node (row layout)
    # gmat_ref:  (C, C)     f32    block-diagonal group-sum matrix
    # gamma_ref: (1, C)     f32    group-norm scale
    # beta_ref:  (1, C)     f32    group-norm bias
    # o_ref:     (Tn, C)    f32
    # scratch:   s1/s2 (B, C), cnt (B, 1), scale/shift (B, C)  -- persist across grid
    phase = pl.program_id(0)
    j = pl.program_id(1)

    # 1x1 conv on the MXU (bf16 operands, f32 accumulation).  Needed in both phases.
    y = jnp.dot(x_ref[...], w_ref[...], preferred_element_type=jnp.float32)  # (Tn, C)
    tile = y.shape[0]

    # ---------------- phase 0: accumulate per-batch sums on the MXU ----------------
    @pl.when(phase == 0)
    def _accumulate():
        @pl.when(j == 0)
        def _init():
            s1_ref[...] = jnp.zeros_like(s1_ref)
            s2_ref[...] = jnp.zeros_like(s2_ref)
            cnt_ref[...] = jnp.zeros_like(cnt_ref)

        bid_row = bidr_ref[...]                                            # (1, Tn)
        seg = jax.lax.broadcasted_iota(jnp.int32, (nbatch, tile), 0)       # (B, Tn)
        oh_t = (seg == bid_row).astype(jnp.float32)                        # (B, Tn)
        # Padded rows carry an out-of-range batch id -> all-zero one-hot rows.
        s1_ref[...] += jnp.dot(oh_t, y, preferred_element_type=jnp.float32)
        s2_ref[...] += jnp.dot(oh_t, y * y, preferred_element_type=jnp.float32)
        cnt_ref[...] += jnp.sum(oh_t, axis=1, keepdims=True)               # (B, 1)

    # ---------------- phase 1: normalize + affine + GELU, one store per tile -------
    @pl.when(phase == 1)
    def _normalize():
        @pl.when(j == 0)
        def _finalize_stats():
            # Per-(batch, group) statistics; group channel-sum via a tiny
            # block-diagonal matmul (MXU) instead of masked lane reductions.
            gmat = gmat_ref[...]                                           # (C, C)
            count = cnt_ref[...] * float(cpg)                              # (B, 1)
            inv_cnt = 1.0 / (count + eps)
            s1g = jnp.dot(s1_ref[...], gmat, preferred_element_type=jnp.float32)
            s2g = jnp.dot(s2_ref[...], gmat, preferred_element_type=jnp.float32)
            mean = s1g * inv_cnt                                           # (B, C)
            # Exact single-pass form of  sum((y - mean)^2) * inv_cnt  with the
            # reference's 1/(count+eps) scaling:
            var = (s2g - mean * s1g * (2.0 - count * inv_cnt)) * inv_cnt
            inv_std = 1.0 / jnp.sqrt(var + eps)                            # (B, C)
            scale = inv_std * gamma_ref[...]
            scale_ref[...] = scale
            shift_ref[...] = beta_ref[...] - mean * scale

        # Gather per-node normalize params with a skinny one-hot matmul (MXU).
        bid_col = bidc_ref[...]                                            # (Tn, 1)
        seg = jax.lax.broadcasted_iota(jnp.int32, (tile, nbatch), 1)       # (Tn, B)
        oh = (bid_col == seg).astype(jnp.float32)                          # (Tn, B)
        scale_n = jnp.dot(oh, scale_ref[...], preferred_element_type=jnp.float32)
        shift_n = jnp.dot(oh, shift_ref[...], preferred_element_type=jnp.float32)
        o_ref[...] = _gelu_erf(y * scale_n + shift_n)   # single full-tile store


def conv1x1_gn_gelu(x, conv_weight, gn_weight, gn_bias, batch_id, batch_size,
                    *, group=32, eps=1e-5, tile_n=512):
    """Fused Conv1x1 (Linear, no bias) + DualOctreeGroupNorm + exact GELU.

    x:           (N, Cin)    f32  node features at `depth`
    conv_weight: (Cout, Cin) f32  (torch.nn.Linear weight layout)
    gn_weight:   (Cout,)     f32  group-norm gamma
    gn_bias:     (Cout,)     f32  group-norm beta
    batch_id:    (N,)        i32  doctree.batch_id(depth)
    batch_size:  python int       doctree.batch_size (static)
    """
    n, cin = x.shape
    cout, cin_w = conv_weight.shape
    assert cin_w == cin and batch_id.shape[0] == n
    group = _resolve_group(cout, group)
    cpg = cout // group

    # Pad the batch-table sublane dim to a multiple of 8 (empty batches get zero
    # counts and are never gathered by real nodes).
    b_pad = max(8, _round_up(int(batch_size), 8))

    # Row tiling: single tile when N is small, otherwise 128-aligned tiles.
    n8 = _round_up(n, 8)
    if n8 <= tile_n:
        tile_n = n8
    else:
        tile_n = _round_up(tile_n, 128)
    n_pad = _round_up(n, tile_n)
    n_tiles = n_pad // tile_n

    # Pad along N; padded rows get an out-of-range batch id so they contribute
    # nothing to the statistics (their output rows are sliced off below).
    batch_id = batch_id.astype(jnp.int32)
    if n_pad != n:
        x = jnp.pad(x, ((0, n_pad - n), (0, 0)))
        batch_id = jnp.pad(batch_id, (0, n_pad - n), constant_values=b_pad)

    # Block-diagonal (C, C) group-sum matrix (== DualOctreeGroupNorm._adjust_for_group).
    ch = jnp.arange(cout, dtype=jnp.int32)
    gmat = (ch[:, None] // cpg == ch[None, :] // cpg).astype(jnp.float32)

    kernel = functools.partial(_conv1x1_gn_gelu_kernel,
                               nbatch=b_pad, cpg=cpg, eps=float(eps))

    # VMEM budget: double-buffered per-row blocks (lane dims pad to 128) + headroom.
    lanepad = lambda c: _round_up(max(int(c), 1), 128)
    bytes_per_row = (2 * 2 * lanepad(cin)        # x bf16, 2 buffers
                     + 2 * 4 * lanepad(1)        # bid column i32, 2 buffers
                     + 2 * 4 * lanepad(cout))    # out f32, 2 buffers
    vmem_limit = bytes_per_row * tile_n + (8 << 20)
    vmem_limit = int(min(max(vmem_limit, 16 << 20), 48 << 20))

    out = pl.pallas_call(
        kernel,
        out_shape=jax.ShapeDtypeStruct((n_pad, cout), jnp.float32),
        grid_spec=pltpu.PrefetchScalarGridSpec(
            num_scalar_prefetch=0,
            grid=(2, n_tiles),                                   # (phase, row tile)
            in_specs=[
                pl.BlockSpec((tile_n, cin), lambda p, j: (j, 0)),    # x
                pl.BlockSpec((cin, cout), lambda p, j: (0, 0)),      # W.T
                pl.BlockSpec((tile_n, 1), lambda p, j: (j, 0)),      # batch id (col)
                pl.BlockSpec((1, tile_n), lambda p, j: (0, j)),      # batch id (row)
                pl.BlockSpec((cout, cout), lambda p, j: (0, 0)),     # group-sum matrix
                pl.BlockSpec((1, cout), lambda p, j: (0, 0)),        # gamma
                pl.BlockSpec((1, cout), lambda p, j: (0, 0)),        # beta
            ],
            # During phase 0 the output block index is pinned to 0, so no HBM
            # writeback happens until phase 1 actually produces each tile.
            out_specs=pl.BlockSpec((tile_n, cout), lambda p, j: (p * j, 0)),
            scratch_shapes=[
                pltpu.VMEM((b_pad, cout), jnp.float32),   # sum_y
                pltpu.VMEM((b_pad, cout), jnp.float32),   # sum_y^2
                pltpu.VMEM((b_pad, 1), jnp.float32),      # node counts
                pltpu.VMEM((b_pad, cout), jnp.float32),   # scale table
                pltpu.VMEM((b_pad, cout), jnp.float32),   # shift table
            ]),
        compiler_params=pltpu.CompilerParams(
            dimension_semantics=("arbitrary", "arbitrary"),
            vmem_limit_bytes=vmem_limit),
    )(x.astype(jnp.bfloat16),
      conv_weight.T.astype(jnp.bfloat16),                 # (Cin, Cout) for x @ w
      batch_id.reshape(n_pad, 1),
      batch_id.reshape(1, n_pad),
      gmat,
      gn_weight.reshape(1, cout).astype(jnp.float32),
      gn_bias.reshape(1, cout).astype(jnp.float32))
    return out[:n]


def _reference(x, conv_weight, gn_weight, gn_bias, batch_id, batch_size, eps=1e-5):
    # Pure-JAX re-implementation of the PyTorch module.
    y = x @ conv_weight.T
    cout = y.shape[1]
    group = _resolve_group(cout)
    cpg = cout // group

    def adjust(t):
        if cpg == 1:
            return t
        s = t.reshape(batch_size, group, cpg).sum(-1, keepdims=True)
        return jnp.broadcast_to(s, (batch_size, group, cpg)).reshape(batch_size, cout)

    ones = jnp.ones((y.shape[0], 1), jnp.float32)
    count = jax.ops.segment_sum(ones, batch_id, num_segments=batch_size) * cpg
    inv_count = 1.0 / (count + eps)
    mean = adjust(jax.ops.segment_sum(y, batch_id, num_segments=batch_size) * inv_count)
    out = y - mean[batch_id]
    var = adjust(jax.ops.segment_sum(out ** 2, batch_id, num_segments=batch_size) * inv_count)
    inv_std = 1.0 / jnp.sqrt(var + eps)
    out = out * inv_std[batch_id]
    out = out * gn_weight.reshape(1, -1) + gn_bias.reshape(1, -1)
    return 0.5 * out * (1.0 + jax.scipy.special.erf(out / jnp.sqrt(2.0)))   # exact GELU


def _run_case(key, channel_in, channel_out, nodes_per_batch, tile_n):
    k_x, k_w, k_g, k_b = jax.random.split(key, 4)
    batch_size = len(nodes_per_batch)
    n = sum(nodes_per_batch)
    batch_id = jnp.concatenate(
        [jnp.full((c,), i, dtype=jnp.int32) for i, c in enumerate(nodes_per_batch)])

    # Keep matmul inputs bf16-exact so correctness is independent of MXU pass count.
    def bf16_exact(a):
        return a.astype(jnp.bfloat16).astype(jnp.float32)

    x = bf16_exact(jax.random.normal(k_x, (n, channel_in), jnp.float32))
    conv_w = bf16_exact(jax.random.normal(k_w, (channel_out, channel_in), jnp.float32)
                        * (1.0 / math.sqrt(channel_in)))
    gamma = 1.0 + 0.5 * jax.random.normal(k_g, (channel_out,), jnp.float32)
    beta = 0.1 * jax.random.normal(k_b, (channel_out,), jnp.float32)

    out = conv1x1_gn_gelu(x, conv_w, gamma, beta, batch_id, batch_size, tile_n=tile_n)
    out = jax.block_until_ready(out)

    ref = _reference(x, conv_w, gamma, beta, batch_id, batch_size)
    assert out.shape == (n, channel_out), out.shape
    max_err = float(jnp.max(jnp.abs(out - ref)))
    assert jnp.allclose(out, ref, atol=1e-4, rtol=1e-4), f"mismatch, max_err={max_err}"


if __name__ == "__main__":
    key = jax.random.PRNGKey(0)
    k1, k2 = jax.random.split(key, 2)

    # Small case (single tile): channel_in=16 -> channel_out=32 => group=8, cpg=4.
    _run_case(k1, channel_in=16, channel_out=32, nodes_per_batch=[9, 7, 8], tile_n=512)

    # Multi-tile case: exercises the pipelined grid, phase accumulation and row padding.
    _run_case(k2, channel_in=16, channel_out=32,
              nodes_per_batch=[300, 250, 420, 180], tile_n=512)

    print("KERNEL_OK")
</pallas_src>

<mosaic_0001>
module attributes {stable_mosaic.version = 11 : i64} {
  func.func @_conv1x1_gn_gelu_kernel(%arg0: i32, %arg1: i32, %arg2: memref<24x16xbf16, #tpu.memory_space<vmem>>, %arg3: memref<16x32xbf16, #tpu.memory_space<vmem>>, %arg4: memref<24x1xi32, #tpu.memory_space<vmem>>, %arg5: memref<1x24xi32, #tpu.memory_space<vmem>>, %arg6: memref<32x32xf32, #tpu.memory_space<vmem>>, %arg7: memref<1x32xf32, #tpu.memory_space<vmem>>, %arg8: memref<1x32xf32, #tpu.memory_space<vmem>>, %arg9: memref<24x32xf32, #tpu.memory_space<vmem>>, %arg10: memref<8x32xf32, #tpu.memory_space<vmem>>, %arg11: memref<8x32xf32, #tpu.memory_space<vmem>>, %arg12: memref<8x1xf32, #tpu.memory_space<vmem>>, %arg13: memref<8x32xf32, #tpu.memory_space<vmem>>, %arg14: memref<8x32xf32, #tpu.memory_space<vmem>>) attributes {dimension_semantics = [#tpu.dimension_semantics<arbitrary>, #tpu.dimension_semantics<arbitrary>], iteration_bounds = array<i64: 2, 1>, scalar_prefetch = 0 : i64, scratch_operands = 5 : i64, tpu.core_type = #tpu.core_type<tc>, window_params = [{transform_indices = @transform_0, window_bounds = array<i64: 24, 16>}, {pipeline_mode = #tpu.pipeline_mode<synchronous>, transform_indices = @transform_1, window_bounds = array<i64: 16, 32>}, {transform_indices = @transform_2, window_bounds = array<i64: 24, 1>}, {transform_indices = @transform_3, window_bounds = array<i64: 1, 24>}, {pipeline_mode = #tpu.pipeline_mode<synchronous>, transform_indices = @transform_4, window_bounds = array<i64: 32, 32>}, {pipeline_mode = #tpu.pipeline_mode<synchronous>, transform_indices = @transform_5, window_bounds = array<i64: 1, 32>}, {pipeline_mode = #tpu.pipeline_mode<synchronous>, transform_indices = @transform_6, window_bounds = array<i64: 1, 32>}, {transform_indices = @transform_7, window_bounds = array<i64: 24, 32>}]} {
    %c0 = arith.constant 0 : index
    %c0_0 = arith.constant 0 : index
    %0 = vector.load %arg2[%c0, %c0_0] : memref<24x16xbf16, #tpu.memory_space<vmem>>, vector<24x16xbf16>
    %c0_1 = arith.constant 0 : index
    %c0_2 = arith.constant 0 : index
    %1 = vector.load %arg3[%c0_1, %c0_2] : memref<16x32xbf16, #tpu.memory_space<vmem>>, vector<16x32xbf16>
    %cst = arith.constant dense<0.000000e+00> : vector<24x32xf32>
    %2 = tpu.matmul %0, %1, %cst {dimension_numbers = #tpu.dot_dimension_numbers<[1], [0], [0], [1], [0, 0, 1, 1], [], []>} : vector<24x16xbf16>, vector<16x32xbf16>, vector<24x32xf32> -> vector<24x32xf32>
    %c0_i32 = arith.constant 0 : i32
    %3 = arith.cmpi eq, %arg0, %c0_i32 : i32
    %4 = arith.extui %3 : i1 to i32
    %c0_i32_3 = arith.constant 0 : i32
    %5 = arith.cmpi ne, %4, %c0_i32_3 : i32
    scf.if %5 {
      %c0_i32_5 = arith.constant 0 : i32
      %9 = arith.cmpi eq, %arg1, %c0_i32_5 : i32
      %10 = arith.extui %9 : i1 to i32
      %c0_i32_6 = arith.constant 0 : i32
      %11 = arith.cmpi ne, %10, %c0_i32_6 : i32
      scf.if %11 {
        %cst_24 = arith.constant 0.000000e+00 : f32
        %32 = vector.broadcast %cst_24 : f32 to vector<8x32xf32>
        %c0_25 = arith.constant 0 : index
        %c0_26 = arith.constant 0 : index
        %33 = vector.load %arg10[%c0_25, %c0_26] : memref<8x32xf32, #tpu.memory_space<vmem>>, vector<8x32xf32>
        tpu.vector_store %arg10[%c0_25, %c0_26], %32 {strides = array<i32>} : memref<8x32xf32, #tpu.memory_space<vmem>>, vector<8x32xf32>,
        %cst_27 = arith.constant 0.000000e+00 : f32
        %34 = vector.broadcast %cst_27 : f32 to vector<8x32xf32>
        %c0_28 = arith.constant 0 : index
        %c0_29 = arith.constant 0 : index
        %35 = vector.load %arg11[%c0_28, %c0_29] : memref<8x32xf32, #tpu.memory_space<vmem>>, vector<8x32xf32>
        tpu.vector_store %arg11[%c0_28, %c0_29], %34 {strides = array<i32>} : memref<8x32xf32, #tpu.memory_space<vmem>>, vector<8x32xf32>,
        %cst_30 = arith.constant 0.000000e+00 : f32
        %36 = vector.broadcast %cst_30 : f32 to vector<8x1xf32>
        %c0_31 = arith.constant 0 : index
        %c0_32 = arith.constant 0 : index
        %37 = vector.load %arg12[%c0_31, %c0_32] : memref<8x1xf32, #tpu.memory_space<vmem>>, vector<8x1xf32>
        tpu.vector_store %arg12[%c0_31, %c0_32], %36 {strides = array<i32>} : memref<8x1xf32, #tpu.memory_space<vmem>>, vector<8x1xf32>,
      } else {
      }
      %c0_7 = arith.constant 0 : index
      %c0_8 = arith.constant 0 : index
      %12 = vector.load %arg5[%c0_7, %c0_8] : memref<1x24xi32, #tpu.memory_space<vmem>>, vector<1x24xi32>
      %13 = tpu.iota {dimensions = array<i32: 0>} : vector<8x24xi32>
      %14 = vector.broadcast %12 : vector<1x24xi32> to vector<8x24xi32>
      %15 = arith.cmpi eq, %13, %14 : vector<8x24xi32>
      %16 = arith.extui %15 : vector<8x24xi1> to vector<8x24xi32>
      %17 = arith.sitofp %16 : vector<8x24xi32> to vector<8x24xf32>
      %c0_9 = arith.constant 0 : index
      %c0_10 = arith.constant 0 : index
      %18 = vector.load %arg10[%c0_9, %c0_10] : memref<8x32xf32, #tpu.memory_space<vmem>>, vector<8x32xf32>
      %cst_11 = arith.constant dense<0.000000e+00> : vector<8x32xf32>
      %19 = tpu.matmul %17, %2, %cst_11 {dimension_numbers = #tpu.dot_dimension_numbers<[1], [0], [0], [1], [0, 0, 1, 1], [], []>} : vector<8x24xf32>, vector<24x32xf32>, vector<8x32xf32> -> vector<8x32xf32>
      %20 = arith.addf %18, %19 : vector<8x32xf32>
      %c0_12 = arith.constant 0 : index
      %c0_13 = arith.constant 0 : index
      %21 = vector.load %arg10[%c0_12, %c0_13] : memref<8x32xf32, #tpu.memory_space<vmem>>, vector<8x32xf32>
      tpu.vector_store %arg10[%c0_12, %c0_13], %20 {strides = array<i32>} : memref<8x32xf32, #tpu.memory_space<vmem>>, vector<8x32xf32>,
      %c0_14 = arith.constant 0 : index
      %c0_15 = arith.constant 0 : index
      %22 = vector.load %arg11[%c0_14, %c0_15] : memref<8x32xf32, #tpu.memory_space<vmem>>, vector<8x32xf32>
      %23 = arith.mulf %2, %2 : vector<24x32xf32>
      %cst_16 = arith.constant dense<0.000000e+00> : vector<8x32xf32>
      %24 = tpu.matmul %17, %23, %cst_16 {dimension_numbers = #tpu.dot_dimension_numbers<[1], [0], [0], [1], [0, 0, 1, 1], [], []>} : vector<8x24xf32>, vector<24x32xf32>, vector<8x32xf32> -> vector<8x32xf32>
      %25 = arith.addf %22, %24 : vector<8x32xf32>
      %c0_17 = arith.constant 0 : index
      %c0_18 = arith.constant 0 : index
      %26 = vector.load %arg11[%c0_17, %c0_18] : memref<8x32xf32, #tpu.memory_space<vmem>>, vector<8x32xf32>
      tpu.vector_store %arg11[%c0_17, %c0_18], %25 {strides = array<i32>} : memref<8x32xf32, #tpu.memory_space<vmem>>, vector<8x32xf32>,
      %c0_19 = arith.constant 0 : index
      %c0_20 = arith.constant 0 : index
      %27 = vector.load %arg12[%c0_19, %c0_20] : memref<8x1xf32, #tpu.memory_space<vmem>>, vector<8x1xf32>
      %cst_21 = arith.constant dense<0.000000e+00> : vector<8xf32>
      %28 = vector.multi_reduction <add>, %17, %cst_21 [1] : vector<8x24xf32> to vector<8xf32>
      %29 = vector.shape_cast %28 : vector<8xf32> to vector<8x1xf32>
      %30 = arith.addf %27, %29 : vector<8x1xf32>
      %c0_22 = arith.constant 0 : index
      %c0_23 = arith.constant 0 : index
      %31 = vector.load %arg12[%c0_22, %c0_23] : memref<8x1xf32, #tpu.memory_space<vmem>>, vector<8x1xf32>
      tpu.vector_store %arg12[%c0_22, %c0_23], %30 {strides = array<i32>} : memref<8x1xf32, #tpu.memory_space<vmem>>, vector<8x1xf32>,
    } else {
    }
    %c1_i32 = arith.constant 1 : i32
    %6 = arith.cmpi eq, %arg0, %c1_i32 : i32
    %7 = arith.extui %6 : i1 to i32
    %c0_i32_4 = arith.constant 0 : i32
    %8 = arith.cmpi ne, %7, %c0_i32_4 : i32
    scf.if %8 {
      %c0_i32_5 = arith.constant 0 : i32
      %9 = arith.cmpi eq, %arg1, %c0_i32_5 : i32
      %10 = arith.extui %9 : i1 to i32
      %c0_i32_6 = arith.constant 0 : i32
      %11 = arith.cmpi ne, %10, %c0_i32_6 : i32
      scf.if %11 {
        %c0_32 = arith.constant 0 : index
        %c0_33 = arith.constant 0 : index
        %68 = vector.load %arg6[%c0_32, %c0_33] : memref<32x32xf32, #tpu.memory_space<vmem>>, vector<32x32xf32>
        %c0_34 = arith.constant 0 : index
        %c0_35 = arith.constant 0 : index
        %69 = vector.load %arg12[%c0_34, %c0_35] : memref<8x1xf32, #tpu.memory_space<vmem>>, vector<8x1xf32>
        %cst_36 = arith.constant 4.000000e+00 : f32
        %70 = vector.broadcast %cst_36 : f32 to vector<8x1xf32>
        %71 = arith.mulf %69, %70 : vector<8x1xf32>
        %cst_37 = arith.constant 9.99999974E-6 : f32
        %72 = vector.broadcast %cst_37 : f32 to vector<8x1xf32>
        %73 = arith.addf %71, %72 : vector<8x1xf32>
        %cst_38 = arith.constant 1.000000e+00 : f32
        %74 = vector.broadcast %cst_38 : f32 to vector<8x1xf32>
        %75 = arith.divf %74, %73 : vector<8x1xf32>
        %c0_39 = arith.constant 0 : index
        %c0_40 = arith.constant 0 : index
        %76 = vector.load %arg10[%c0_39, %c0_40] : memref<8x32xf32, #tpu.memory_space<vmem>>, vector<8x32xf32>
        %cst_41 = arith.constant dense<0.000000e+00> : vector<8x32xf32>
        %77 = tpu.matmul %76, %68, %cst_41 {dimension_numbers = #tpu.dot_dimension_numbers<[1], [0], [0], [1], [0, 0, 1, 1], [], []>} : vector<8x32xf32>, vector<32x32xf32>, vector<8x32xf32> -> vector<8x32xf32>
        %c0_42 = arith.constant 0 : index
        %c0_43 = arith.constant 0 : index
        %78 = vector.load %arg11[%c0_42, %c0_43] : memref<8x32xf32, #tpu.memory_space<vmem>>, vector<8x32xf32>
        %cst_44 = arith.constant dense<0.000000e+00> : vector<8x32xf32>
        %79 = tpu.matmul %78, %68, %cst_44 {dimension_numbers = #tpu.dot_dimension_numbers<[1], [0], [0], [1], [0, 0, 1, 1], [], []>} : vector<8x32xf32>, vector<32x32xf32>, vector<8x32xf32> -> vector<8x32xf32>
        %80 = vector.broadcast %75 : vector<8x1xf32> to vector<8x32xf32>
        %81 = arith.mulf %77, %80 : vector<8x32xf32>
        %82 = arith.mulf %81, %77 : vector<8x32xf32>
        %83 = arith.mulf %71, %75 : vector<8x1xf32>
        %cst_45 = arith.constant 2.000000e+00 : f32
        %84 = vector.broadcast %cst_45 : f32 to vector<8x1xf32>
        %85 = arith.subf %84, %83 : vector<8x1xf32>
        %86 = vector.broadcast %85 : vector<8x1xf32> to vector<8x32xf32>
        %87 = arith.mulf %82, %86 : vector<8x32xf32>
        %88 = arith.subf %79, %87 : vector<8x32xf32>
        %89 = vector.broadcast %75 : vector<8x1xf32> to vector<8x32xf32>
        %90 = arith.mulf %88, %89 : vector<8x32xf32>
        %cst_46 = arith.constant 9.99999974E-6 : f32
        %91 = vector.broadcast %cst_46 : f32 to vector<8x32xf32>
        %92 = arith.addf %90, %91 : vector<8x32xf32>
        %93 = math.sqrt %92 : vector<8x32xf32>
        %cst_47 = arith.constant 1.000000e+00 : f32
        %94 = vector.broadcast %cst_47 : f32 to vector<8x32xf32>
        %95 = arith.divf %94, %93 : vector<8x32xf32>
        %c0_48 = arith.constant 0 : index
        %c0_49 = arith.constant 0 : index
        %96 = vector.load %arg7[%c0_48, %c0_49] : memref<1x32xf32, #tpu.memory_space<vmem>>, vector<1x32xf32>
        %97 = vector.broadcast %96 : vector<1x32xf32> to vector<8x32xf32>
        %98 = arith.mulf %95, %97 : vector<8x32xf32>
        %c0_50 = arith.constant 0 : index
        %c0_51 = arith.constant 0 : index
        %99 = vector.load %arg13[%c0_50, %c0_51] : memref<8x32xf32, #tpu.memory_space<vmem>>, vector<8x32xf32>
        tpu.vector_store %arg13[%c0_50, %c0_51], %98 {strides = array<i32>} : memref<8x32xf32, #tpu.memory_space<vmem>>, vector<8x32xf32>,
        %c0_52 = arith.constant 0 : index
        %c0_53 = arith.constant 0 : index
        %100 = vector.load %arg8[%c0_52, %c0_53] : memref<1x32xf32, #tpu.memory_space<vmem>>, vector<1x32xf32>
        %101 = arith.mulf %81, %98 : vector<8x32xf32>
        %102 = vector.broadcast %100 : vector<1x32xf32> to vector<8x32xf32>
        %103 = arith.subf %102, %101 : vector<8x32xf32>
        %c0_54 = arith.constant 0 : index
        %c0_55 = arith.constant 0 : index
        %104 = vector.load %arg14[%c0_54, %c0_55] : memref<8x32xf32, #tpu.memory_space<vmem>>, vector<8x32xf32>
        tpu.vector_store %arg14[%c0_54, %c0_55], %103 {strides = array<i32>} : memref<8x32xf32, #tpu.memory_space<vmem>>, vector<8x32xf32>,
      } else {
      }
      %c0_7 = arith.constant 0 : index
      %c0_8 = arith.constant 0 : index
      %12 = vector.load %arg4[%c0_7, %c0_8] : memref<24x1xi32, #tpu.memory_space<vmem>>, vector<24x1xi32>
      %13 = tpu.iota {dimensions = array<i32: 1>} : vector<24x8xi32>
      %14 = vector.broadcast %12 : vector<24x1xi32> to vector<24x8xi32>
      %15 = arith.cmpi eq, %14, %13 : vector<24x8xi32>
      %16 = arith.extui %15 : vector<24x8xi1> to vector<24x8xi32>
      %17 = arith.sitofp %16 : vector<24x8xi32> to vector<24x8xf32>
      %c0_9 = arith.constant 0 : index
      %c0_10 = arith.constant 0 : index
      %18 = vector.load %arg13[%c0_9, %c0_10] : memref<8x32xf32, #tpu.memory_space<vmem>>, vector<8x32xf32>
      %cst_11 = arith.constant dense<0.000000e+00> : vector<24x32xf32>
      %19 = tpu.matmul %17, %18, %cst_11 {dimension_numbers = #tpu.dot_dimension_numbers<[1], [0], [0], [1], [0, 0, 1, 1], [], []>} : vector<24x8xf32>, vector<8x32xf32>, vector<24x32xf32> -> vector<24x32xf32>
      %c0_12 = arith.constant 0 : index
      %c0_13 = arith.constant 0 : index
      %20 = vector.load %arg14[%c0_12, %c0_13] : memref<8x32xf32, #tpu.memory_space<vmem>>, vector<8x32xf32>
      %cst_14 = arith.constant dense<0.000000e+00> : vector<24x32xf32>
      %21 = tpu.matmul %17, %20, %cst_14 {dimension_numbers = #tpu.dot_dimension_numbers<[1], [0], [0], [1], [0, 0, 1, 1], [], []>} : vector<24x8xf32>, vector<8x32xf32>, vector<24x32xf32> -> vector<24x32xf32>
      %22 = arith.mulf %2, %19 : vector<24x32xf32>
      %23 = arith.addf %22, %21 : vector<24x32xf32>
      %cst_15 = arith.constant 0.707106769 : f32
      %24 = vector.broadcast %cst_15 : f32 to vector<24x32xf32>
      %25 = arith.mulf %23, %24 : vector<24x32xf32>
      %26 = math.absf %25 : vector<24x32xf32>
      %cst_16 = arith.constant 0.327591091 : f32
      %27 = vector.broadcast %cst_16 : f32 to vector<24x32xf32>
      %28 = arith.mulf %27, %26 : vector<24x32xf32>
      %cst_17 = arith.constant 1.000000e+00 : f32
      %29 = vector.broadcast %cst_17 : f32 to vector<24x32xf32>
      %30 = arith.addf %29, %28 : vector<24x32xf32>
      %31 = tpu.reciprocal %30 {approx = true} : vector<24x32xf32> -> vector<24x32xf32>
      %32 = arith.mulf %30, %31 : vector<24x32xf32>
      %cst_18 = arith.constant 2.000000e+00 : f32
      %33 = vector.broadcast %cst_18 : f32 to vector<24x32xf32>
      %34 = arith.subf %33, %32 : vector<24x32xf32>
      %35 = arith.mulf %31, %34 : vector<24x32xf32>
      %cst_19 = arith.constant 1.06140542 : f32
      %36 = vector.broadcast %cst_19 : f32 to vector<24x32xf32>
      %37 = arith.mulf %35, %36 : vector<24x32xf32>
      %cst_20 = arith.constant -1.45315206 : f32
      %38 = vector.broadcast %cst_20 : f32 to vector<24x32xf32>
      %39 = arith.addf %38, %37 : vector<24x32xf32>
      %40 = arith.mulf %35, %39 : vector<24x32xf32>
      %cst_21 = arith.constant 1.42141378 : f32
      %41 = vector.broadcast %cst_21 : f32 to vector<24x32xf32>
      %42 = arith.addf %41, %40 : vector<24x32xf32>
      %43 = arith.mulf %35, %42 : vector<24x32xf32>
      %cst_22 = arith.constant -0.284496725 : f32
      %44 = vector.broadcast %cst_22 : f32 to vector<24x32xf32>
      %45 = arith.addf %44, %43 : vector<24x32xf32>
      %46 = arith.mulf %35, %45 : vector<24x32xf32>
      %cst_23 = arith.constant 0.254829586 : f32
      %47 = vector.broadcast %cst_23 : f32 to vector<24x32xf32>
      %48 = arith.addf %47, %46 : vector<24x32xf32>
      %49 = arith.mulf %35, %48 : vector<24x32xf32>
      %cst_24 = arith.constant 0.000000e+00 : f32
      %50 = vector.broadcast %cst_24 : f32 to vector<24x32xf32>
      %51 = arith.subf %50, %26 : vector<24x32xf32>
      %52 = arith.mulf %51, %26 : vector<24x32xf32>
      %53 = math.exp %52 : vector<24x32xf32>
      %54 = arith.mulf %49, %53 : vector<24x32xf32>
      %cst_25 = arith.constant 1.000000e+00 : f32
      %55 = vector.broadcast %cst_25 : f32 to vector<24x32xf32>
      %56 = arith.subf %55, %54 : vector<24x32xf32>
      %cst_26 = arith.constant 0.000000e+00 : f32
      %57 = vector.broadcast %cst_26 : f32 to vector<24x32xf32>
      %58 = arith.cmpf olt, %25, %57 : vector<24x32xf32>
      %cst_27 = arith.constant 0.000000e+00 : f32
      %59 = vector.broadcast %cst_27 : f32 to vector<24x32xf32>
      %60 = arith.subf %59, %56 : vector<24x32xf32>
      %61 = arith.select %58, %60, %56 : vector<24x32xi1>, vector<24x32xf32>
      %cst_28 = arith.constant 5.000000e-01 : f32
      %62 = vector.broadcast %cst_28 : f32 to vector<24x32xf32>
      %63 = arith.mulf %62, %23 : vector<24x32xf32>
      %cst_29 = arith.constant 1.000000e+00 : f32
      %64 = vector.broadcast %cst_29 : f32 to vector<24x32xf32>
      %65 = arith.addf %64, %61 : vector<24x32xf32>
      %66 = arith.mulf %63, %65 : vector<24x32xf32>
      %c0_30 = arith.constant 0 : index
      %c0_31 = arith.constant 0 : index
      %67 = vector.load %arg9[%c0_30, %c0_31] : memref<24x32xf32, #tpu.memory_space<vmem>>, vector<24x32xf32>
      tpu.vector_store %arg9[%c0_30, %c0_31], %66 {strides = array<i32>} : memref<24x32xf32, #tpu.memory_space<vmem>>, vector<24x32xf32>,
    } else {
    }
    return
  }
  func.func @transform_0(%arg0: i32, %arg1: i32) -> (i32, i32) {
    %c0_i32 = arith.constant 0 : i32
    %c0_i32_0 = arith.constant 0 : i32
    return %arg1, %c0_i32 : i32, i32
  }
  func.func @transform_1(%arg0: i32, %arg1: i32) -> (i32, i32) {
    %c0_i32 = arith.constant 0 : i32
    %c0_i32_0 = arith.constant 0 : i32
    %c0_i32_1 = arith.constant 0 : i32
    return %c0_i32, %c0_i32_0 : i32, i32
  }
  func.func @transform_2(%arg0: i32, %arg1: i32) -> (i32, i32) {
    %c0_i32 = arith.constant 0 : i32
    %c0_i32_0 = arith.constant 0 : i32
    return %arg1, %c0_i32 : i32, i32
  }
  func.func @transform_3(%arg0: i32, %arg1: i32) -> (i32, i32) {
    %c0_i32 = arith.constant 0 : i32
    %c0_i32_0 = arith.constant 0 : i32
    return %c0_i32, %arg1 : i32, i32
  }
  func.func @transform_4(%arg0: i32, %arg1: i32) -> (i32, i32) {
    %c0_i32 = arith.constant 0 : i32
    %c0_i32_0 = arith.constant 0 : i32
    %c0_i32_1 = arith.constant 0 : i32
    return %c0_i32, %c0_i32_0 : i32, i32
  }
  func.func @transform_5(%arg0: i32, %arg1: i32) -> (i32, i32) {
    %c0_i32 = arith.constant 0 : i32
    %c0_i32_0 = arith.constant 0 : i32
    %c0_i32_1 = arith.constant 0 : i32
    return %c0_i32, %c0_i32_0 : i32, i32
  }
  func.func @transform_6(%arg0: i32, %arg1: i32) -> (i32, i32) {
    %c0_i32 = arith.constant 0 : i32
    %c0_i32_0 = arith.constant 0 : i32
    %c0_i32_1 = arith.constant 0 : i32
    return %c0_i32, %c0_i32_0 : i32, i32
  }
  func.func @transform_7(%arg0: i32, %arg1: i32) -> (i32, i32) {
    %0 = arith.muli %arg0, %arg1 : i32
    %c0_i32 = arith.constant 0 : i32
    %c0_i32_0 = arith.constant 0 : i32
    return %0, %c0_i32 : i32, i32
  }
}

</mosaic_0001>

<llo_original>
// kernel: tpu_custom_call.1
$region0: #{tpu_custom_call.1}
  #allocation0 [shape = 'u32[]', space=smem, size = 0x4, offset = 0x4, fixed_abs, tag = 'smem constant byte address 0x4 - core index']
  #allocation1 [shape = 'u32[72,128]{1,0:T(1,128)}', space=vmem, size = 0x9000, scoped, tag = 'internal scratch']
  #allocation2 [shape = 'f32[8,32]{1,0:T(8,128)}', space=vmem, size = 0x1000, scoped, tag = 'scratch operand']
  #allocation3 [shape = 'f32[8,32]{1,0:T(8,128)}', space=vmem, size = 0x1000, scoped, tag = 'scratch operand']
  #allocation4 [shape = 'f32[8,1]{1,0:T(8,128)}', space=vmem, size = 0x1000, scoped, tag = 'scratch operand']
  #allocation5 [shape = 'f32[8,32]{1,0:T(8,128)}', space=vmem, size = 0x1000, scoped, tag = 'scratch operand']
  #allocation6 [shape = 'f32[8,32]{1,0:T(8,128)}', space=vmem, size = 0x1000, scoped, tag = 'scratch operand']
  %s0 = inlined_call_operand.vmem [shape: bf16[24,16], index: 0, kind: input, shape index: {}]
  %s1 = inlined_call_operand.vmem [shape: bf16[16,32], index: 1, kind: input, shape index: {}]
  %s2 = inlined_call_operand.vmem [shape: s32[24,1], index: 2, kind: input, shape index: {}]
  %s3 = inlined_call_operand.vmem [shape: s32[1,24], index: 3, kind: input, shape index: {}]
  %s4 = inlined_call_operand.vmem [shape: f32[32,32], index: 4, kind: input, shape index: {}]
  %s5 = inlined_call_operand.vmem [shape: f32[1,32], index: 5, kind: input, shape index: {}]
  %s6 = inlined_call_operand.vmem [shape: f32[1,32], index: 6, kind: input, shape index: {}]
  %s7 = inlined_call_operand.hbm [shape: f32[24,32], index: 7, kind: output, shape index: {}]
  %s8 = sld [smem:[#allocation0]]
  $region77: #{tpu_custom_call.1} parent=0
    _
  %s10 = ssub.s32 1, %s8
  %s11 = scalar_select 0, %s10, %s8
  $region1: #{tpu_custom_call.1} parent=0
    #allocation7 [shape = 'u8[24576]{0}', space=vmem, size = 0x6000, scoped, tag = 'output window, operand 0']
    #allocation8 [shape = 's32[2]{0}', space=sflag, size = 0x8, scoped, tag = 'scoped memory for tpu_custom_call.1']
    %12 = vsyncpa [#allocation8], 0
    %s13 = scalar_lea.sflag [#allocation8], 1
    %14 = vsyncpa %s13, 0
    loop: start=0, step=1, limit=4
    $region2: #{tpu_custom_call.1} parent=1 // loop_pre_header
      _
    $region3: #{tpu_custom_call.1} parent=1 // loop_header
      %s16 = sphi 0, %s20
      %p17 = scmp.ge.s32.totalorder %s16, 4
      %s23 = sphi 0, %s35
      %s24 = sphi 0, %s31
      %s25 = sphi 0, %s23
      %s26 = sphi 0, %s24
      %s27 = sphi 0, %s25
      %s28 = sphi 0, %s26
      %s38 = sphi 0, %s40
      %s41 = sphi 0, %s38
      %s42 = sphi 0, %s41
      %s58 = sphi 0, %s42
      %s62 = sphi 0, %s62
      %s64 = sphi 0, %s62
      %s65 = sphi 0, %s64
      %s79 = sphi 0, %s65
      %s85 = sphi 0, %s87
      %s88 = sphi 0, %s85
      %s89 = sphi 0, %s88
      %s105 = sphi 0, %s89
      %s111 = sphi 0, %s113
      %s114 = sphi 0, %s111
      %s115 = sphi 0, %s114
      %s131 = sphi 0, %s115
      %s135 = sphi 0, %s135
      %s137 = sphi 0, %s135
      %s138 = sphi 0, %s137
      %s152 = sphi 0, %s138
      %s156 = sphi 0, %s156
      %s158 = sphi 0, %s156
      %s159 = sphi 0, %s158
      %s173 = sphi 0, %s159
      %s177 = sphi 0, %s177
      %s179 = sphi 0, %s177
      %s180 = sphi 0, %s179
      %s194 = sphi 0, %s180
      %s202 = sphi 0, %s204
      %s205 = sphi 0, %s202
      %s206 = sphi 0, %s205
      %s222 = sphi 0, %s206
    $region4: #{tpu_custom_call.1} parent=1 // loop_header_branch
      %19 = sbr.rel (%p17) target = $region8
    $region5: #{tpu_custom_call.1} parent=1 // loop_body
      %s21 = ssub.s32 %s16, 1
      %s22 = ssub.s32 %s16, 2
      %s29 = sadd.s32 1, %s24
      %p30 = scmp.ge.s32.totalorder %s29, 1
      %s31 = scalar_select %p30, 0, %s29
      %s32 = sadd.s32 1, %s23
      %s33 = scalar_select %p30, %s32, %s23
      %p34 = scmp.ge.s32.totalorder %s33, 2
      %s35 = scalar_select %p34, 0, %s33
      %s36 = ssub.s32 %s24, %s31
      %p37 = scmp.eq.s32.totalorder %s36, 0
      %s39 = sadd.s32 %s38, 1
      %s40 = scalar_select %p37, %s38, %s39
      %p43 = pneg %p37
      %p44 = scmp.eq.s32.totalorder %s16, 1
      %p45 = por %p43, %p44
      %p46 = scmp.ne.s32.totalorder %s38, %s41
      %p47 = scmp.eq.s32.totalorder %s16, 0
      %p48 = por %p46, %p47
      %p49 = scmp.ne.s32.totalorder %s38, %s41
      %p50 = scmp.eq.s32.totalorder %s21, 1
      %p51 = por %p49, %p50
      %p52 = scmp.ne.s32.totalorder %s41, %s42
      %p53 = scmp.eq.s32.totalorder %s21, 0
      %p54 = por %p52, %p53
      %p55 = scmp.ne.s32.totalorder %s41, %s42
      %p56 = scmp.eq.s32.totalorder %s22, 1
      %p57 = por %p55, %p56
      %p59 = scmp.ne.s32.totalorder %s42, %s58
      %p60 = scmp.eq.s32.totalorder %s22, 0
      %p61 = por %p59, %p60
      %s63 = sadd.s32 %s62, 1
      %p66 = scmp.eq.s32.totalorder %s16, 1
      %p67 = scmp.ne.s32.totalorder %s62, %s64
      %p68 = scmp.eq.s32.totalorder %s16, 0
      %p69 = por %p67, %p68
      %p70 = scmp.ne.s32.totalorder %s62, %s64
      %p71 = scmp.eq.s32.totalorder %s21, 1
      %p72 = por %p70, %p71
      %p73 = scmp.ne.s32.totalorder %s64, %s65
      %p74 = scmp.eq.s32.totalorder %s21, 0
      %p75 = por %p73, %p74
      %p76 = scmp.ne.s32.totalorder %s64, %s65
      %p77 = scmp.eq.s32.totalorder %s22, 1
      %p78 = por %p76, %p77
      %p80 = scmp.ne.s32.totalorder %s65, %s79
      %p81 = scmp.eq.s32.totalorder %s22, 0
      %p82 = por %p80, %p81
      %s83 = ssub.s32 %s24, %s31
      %p84 = scmp.eq.s32.totalorder %s83, 0
      %s86 = sadd.s32 %s85, 1
      %s87 = scalar_select %p84, %s85, %s86
      %p90 = pneg %p84
      %p91 = scmp.eq.s32.totalorder %s16, 1
      %p92 = por %p90, %p91
      %p93 = scmp.ne.s32.totalorder %s85, %s88
      %p94 = scmp.eq.s32.totalorder %s16, 0
      %p95 = por %p93, %p94
      %p96 = scmp.ne.s32.totalorder %s85, %s88
      %p97 = scmp.eq.s32.totalorder %s21, 1
      %p98 = por %p96, %p97
      %p99 = scmp.ne.s32.totalorder %s88, %s89
      %p100 = scmp.eq.s32.totalorder %s21, 0
      %p101 = por %p99, %p100
      %p102 = scmp.ne.s32.totalorder %s88, %s89
      %p103 = scmp.eq.s32.totalorder %s22, 1
      %p104 = por %p102, %p103
      %p106 = scmp.ne.s32.totalorder %s89, %s105
      %p107 = scmp.eq.s32.totalorder %s22, 0
      %p108 = por %p106, %p107
      %s109 = ssub.s32 %s24, %s31
      %p110 = scmp.eq.s32.totalorder %s109, 0
      %s112 = sadd.s32 %s111, 1
      %s113 = scalar_select %p110, %s111, %s112
      %p116 = pneg %p110
      %p117 = scmp.eq.s32.totalorder %s16, 1
      %p118 = por %p116, %p117
      %p119 = scmp.ne.s32.totalorder %s111, %s114
      %p120 = scmp.eq.s32.totalorder %s16, 0
      %p121 = por %p119, %p120
      %p122 = scmp.ne.s32.totalorder %s111, %s114
      %p123 = scmp.eq.s32.totalorder %s21, 1
      %p124 = por %p122, %p123
      %p125 = scmp.ne.s32.totalorder %s114, %s115
      %p126 = scmp.eq.s32.totalorder %s21, 0
      %p127 = por %p125, %p126
      %p128 = scmp.ne.s32.totalorder %s114, %s115
      %p129 = scmp.eq.s32.totalorder %s22, 1
      %p130 = por %p128, %p129
      %p132 = scmp.ne.s32.totalorder %s115, %s131
      %p133 = scmp.eq.s32.totalorder %s22, 0
      %p134 = por %p132, %p133
      %s136 = sadd.s32 %s135, 1
      %p139 = scmp.eq.s32.totalorder %s16, 1
      %p140 = scmp.ne.s32.totalorder %s135, %s137
      %p141 = scmp.eq.s32.totalorder %s16, 0
      %p142 = por %p140, %p141
      %p143 = scmp.ne.s32.totalorder %s135, %s137
      %p144 = scmp.eq.s32.totalorder %s21, 1
      %p145 = por %p143, %p144
      %p146 = scmp.ne.s32.totalorder %s137, %s138
      %p147 = scmp.eq.s32.totalorder %s21, 0
      %p148 = por %p146, %p147
      %p149 = scmp.ne.s32.totalorder %s137, %s138
      %p150 = scmp.eq.s32.totalorder %s22, 1
      %p151 = por %p149, %p150
      %p153 = scmp.ne.s32.totalorder %s138, %s152
      %p154 = scmp.eq.s32.totalorder %s22, 0
      %p155 = por %p153, %p154
      %s157 = sadd.s32 %s156, 1
      %p160 = scmp.eq.s32.totalorder %s16, 1
      %p161 = scmp.ne.s32.totalorder %s156, %s158
      %p162 = scmp.eq.s32.totalorder %s16, 0
      %p163 = por %p161, %p162
      %p164 = scmp.ne.s32.totalorder %s156, %s158
      %p165 = scmp.eq.s32.totalorder %s21, 1
      %p166 = por %p164, %p165
      %p167 = scmp.ne.s32.totalorder %s158, %s159
      %p168 = scmp.eq.s32.totalorder %s21, 0
      %p169 = por %p167, %p168
      %p170 = scmp.ne.s32.totalorder %s158, %s159
      %p171 = scmp.eq.s32.totalorder %s22, 1
      %p172 = por %p170, %p171
      %p174 = scmp.ne.s32.totalorder %s159, %s173
      %p175 = scmp.eq.s32.totalorder %s22, 0
      %p176 = por %p174, %p175
      %s178 = sadd.s32 %s177, 1
      %p181 = scmp.eq.s32.totalorder %s16, 1
      %p182 = scmp.ne.s32.totalorder %s177, %s179
      %p183 = scmp.eq.s32.totalorder %s16, 0
      %p184 = por %p182, %p183
      %p185 = scmp.ne.s32.totalorder %s177, %s179
      %p186 = scmp.eq.s32.totalorder %s21, 1
      %p187 = por %p185, %p186
      %p188 = scmp.ne.s32.totalorder %s179, %s180
      %p189 = scmp.eq.s32.totalorder %s21, 0
      %p190 = por %p188, %p189
      %p191 = scmp.ne.s32.totalorder %s179, %s180
      %p192 = scmp.eq.s32.totalorder %s22, 1
      %p193 = por %p191, %p192
      %p195 = scmp.ne.s32.totalorder %s180, %s194
      %p196 = scmp.eq.s32.totalorder %s22, 0
      %p197 = por %p195, %p196
      %s198 = smul.u32 %s23, %s24
      %s199 = smul.u32 %s35, %s31
      %s200 = ssub.s32 %s198, %s199
      %p201 = scmp.eq.s32.totalorder %s200, 0
      %s203 = sadd.s32 %s202, 1
      %s204 = scalar_select %p201, %s202, %s203
      %p207 = pneg %p201
      %p208 = scmp.eq.s32.totalorder %s16, 1
      %p209 = por %p207, %p208
      %p210 = scmp.ne.s32.totalorder %s202, %s205
      %p211 = scmp.eq.s32.totalorder %s16, 0
      %p212 = por %p210, %p211
      %p213 = scmp.ne.s32.totalorder %s202, %s205
      %p214 = scmp.eq.s32.totalorder %s21, 1
      %p215 = por %p213, %p214
      %p216 = scmp.ne.s32.totalorder %s205, %s206
      %p217 = scmp.eq.s32.totalorder %s21, 0
      %p218 = por %p216, %p217
      %p219 = scmp.ne.s32.totalorder %s205, %s206
      %p220 = scmp.eq.s32.totalorder %s22, 1
      %p221 = por %p219, %p220
      %p223 = scmp.ne.s32.totalorder %s206, %s222
      %p224 = scmp.eq.s32.totalorder %s22, 0
      %p225 = por %p223, %p224
      %p226 = scmp.le.s32.totalorder 1, %s16
      %p227 = scmp.lt.s32.totalorder %s16, 3
      %p228 = pnand %p226, %p227
      %p229 = pneg %p228
      // Predicated region
      $region9: #{tpu_custom_call.1} parent=5 // pred_check
        _
      $region10: #{tpu_custom_call.1} parent=5 // pred_check_branch
        %231 = sbr.rel (%p228) target = $region12
      $region11: #{tpu_custom_call.1} parent=5 // pred_region
        %s232 = ssub.s32 %s16, 1
        // Predicated region
        $region13: #{tpu_custom_call.1} parent=11 // pred_check
          %p233 = pneg %p54
        $region14: #{tpu_custom_call.1} parent=11 // pred_check_branch
          %235 = sbr.rel (%p233) target = $region16
        $region15: #{tpu_custom_call.1} parent=11 // pred_region
          %s236 = smul.u32 3, %s26
          %p237 = scmp.lt.s32.totalorder %s236, 2
          %s238 = scalar_select %p237, %s236, 2
          %s239 = smul.addr %s238, 4
          %s240 = scalar_lea.vmem %s0, %s239
          %s241 = smul.u32 3, %s26
        $region16: #{tpu_custom_call.1} parent=11 // pred_fallthru
          _
        // Predicated region
        $region17: #{tpu_custom_call.1} parent=11 // pred_check
          %p242 = pneg %p75
        $region18: #{tpu_custom_call.1} parent=11 // pred_check_branch
          %244 = sbr.rel (%p242) target = $region20
        $region19: #{tpu_custom_call.1} parent=11 // pred_region
          _
        $region20: #{tpu_custom_call.1} parent=11 // pred_fallthru
          _
        // Predicated region
        $region21: #{tpu_custom_call.1} parent=11 // pred_check
          %p245 = pneg %p101
        $region22: #{tpu_custom_call.1} parent=11 // pred_check_branch
          %247 = sbr.rel (%p245) target = $region24
        $region23: #{tpu_custom_call.1} parent=11 // pred_region
          %s248 = smul.u32 3, %s26
          %p249 = scmp.lt.s32.totalorder %s248, 2
          %s250 = scalar_select %p249, %s248, 2
          %s251 = smul.addr %s250, 8
          %s252 = scalar_lea.vmem %s2, %s251
          %s253 = smul.u32 3, %s26
        $region24: #{tpu_custom_call.1} parent=11 // pred_fallthru
          _
        // Predicated region
        $region25: #{tpu_custom_call.1} parent=11 // pred_check
          %p254 = pneg %p127
        $region26: #{tpu_custom_call.1} parent=11 // pred_check_branch
          %256 = sbr.rel (%p254) target = $region28
        $region27: #{tpu_custom_call.1} parent=11 // pred_region
          %p257 = scmp.lt.s32.totalorder %s26, 0
          %s258 = scalar_select %p257, %s26, 0
          %s259 = scalar_lea.vmem %s3, %s258
        $region28: #{tpu_custom_call.1} parent=11 // pred_fallthru
          _
        // Predicated region
        $region29: #{tpu_custom_call.1} parent=11 // pred_check
          %p260 = pneg %p148
        $region30: #{tpu_custom_call.1} parent=11 // pred_check_branch
          %262 = sbr.rel (%p260) target = $region32
        $region31: #{tpu_custom_call.1} parent=11 // pred_region
          _
        $region32: #{tpu_custom_call.1} parent=11 // pred_fallthru
          _
        // Predicated region
        $region33: #{tpu_custom_call.1} parent=11 // pred_check
          %p263 = pneg %p169
        $region34: #{tpu_custom_call.1} parent=11 // pred_check_branch
          %265 = sbr.rel (%p263) target = $region36
        $region35: #{tpu_custom_call.1} parent=11 // pred_region
          _
        $region36: #{tpu_custom_call.1} parent=11 // pred_fallthru
          _
        // Predicated region
        $region37: #{tpu_custom_call.1} parent=11 // pred_check
          %p266 = pneg %p190
        $region38: #{tpu_custom_call.1} parent=11 // pred_check_branch
          %268 = sbr.rel (%p266) target = $region40
        $region39: #{tpu_custom_call.1} parent=11 // pred_region
          _
        $region40: #{tpu_custom_call.1} parent=11 // pred_fallthru
          _
      $region12: #{tpu_custom_call.1} parent=5 // pred_fallthru
        _
      %p269 = scmp.lt.s32.totalorder %s16, 2
      // Predicated region
      $region41: #{tpu_custom_call.1} parent=5 // pred_check
        %p270 = pneg %p269
      $region42: #{tpu_custom_call.1} parent=5 // pred_check_branch
        %272 = sbr.rel (%p270) target = $region44
      $region43: #{tpu_custom_call.1} parent=5 // pred_region
        _
      $region44: #{tpu_custom_call.1} parent=5 // pred_fallthru
        _
      %p273 = scmp.le.s32.totalorder 1, %s16
      %p274 = scmp.lt.s32.totalorder %s16, 3
      %p275 = pnand %p273, %p274
      %p276 = pneg %p275
      // Predicated region
      $region45: #{tpu_custom_call.1} parent=5 // pred_check
        _
      $region46: #{tpu_custom_call.1} parent=5 // pred_check_branch
        %278 = sbr.rel (%p275) target = $region48
      $region47: #{tpu_custom_call.1} parent=5 // pred_region
        %s279 = ssub.s32 %s16, 1
        %s280 = smul.u32 3, %s26
        %p281 = scmp.lt.s32.totalorder %s280, 2
        %s282 = scalar_select %p281, %s280, 2
        %s283 = smul.addr %s282, 4
        %s284 = scalar_lea.vmem %s0, %s283
        %p285 = pneg %p54
        %p286 = pneg %p51
        %p287 = pneg %p75
        %p288 = pneg %p72
        %s289 = smul.u32 3, %s26
        %p290 = scmp.lt.s32.totalorder %s289, 2
        %s291 = scalar_select %p290, %s289, 2
        %s292 = smul.addr %s291, 8
        %s293 = scalar_lea.vmem %s2, %s292
        %p294 = pneg %p101
        %p295 = pneg %p98
        %p296 = scmp.lt.s32.totalorder %s26, 0
        %s297 = scalar_select %p296, %s26, 0
        %s298 = scalar_lea.vmem %s3, %s297
        %p299 = pneg %p127
        %p300 = pneg %p124
        %p301 = pneg %p148
        %p302 = pneg %p145
        %p303 = pneg %p169
        %p304 = pneg %p166
        %p305 = pneg %p190
        %p306 = pneg %p187
        %p307 = pneg %p218
        %p308 = pneg %p215
        %s309 = sand.u32 %s205, 1
        %s310 = scalar_lea.sflag [#allocation8], %s309
        %s311 = sand.u32 %s205, 1
        %s312 = smul.addr %s311, 24
        %s313 = scalar_lea.vmem [#allocation7], %s312
        %s314 = smul.u32 3, %s26
        %p315 = scmp.lt.s32.totalorder %s314, 2
        %s316 = scalar_select %p315, %s314, 2
        %s317 = smul.addr %s316, 4
        %s318 = scalar_lea.vmem %s0, %s317
        %s319 = smul.u32 3, %s26
        %s320 = smul.u32 3, %s26
        %p321 = scmp.lt.s32.totalorder %s320, 2
        %s322 = scalar_select %p321, %s320, 2
        %s323 = smul.addr %s322, 8
        %s324 = scalar_lea.vmem %s2, %s323
        %s325 = smul.u32 3, %s26
        %p326 = scmp.lt.s32.totalorder %s26, 0
        %s327 = scalar_select %p326, %s26, 0
        %s328 = scalar_lea.vmem %s3, %s327
        %s329 = smul.u32 %s25, %s26
        %s330 = smul.u32 3, %s329
        %v332 = vld [vmem:[%s318] sm:$0xf]
        %v333 = vld [vmem:[%s318 + $0x4] sm:$0xf]
        %v334 = vld [vmem:[%s318 + $0x8] sm:$0xf]
        %v335 = vld [vmem:[%s1] sm:$0xf]
        %v336 = vld [vmem:[%s1 + $0x4] sm:$0xf]
        %v340 = vunpack.c.l.b16 %v332
        %v341 = vunpack.c.l.b16 %v333
        %v342 = vunpack.c.l.b16 %v334
        %v343 = vpack.c.b16 %v341, %v340
        %v344 = vpack.c.b16 %v342, %v342
        %v347 = vunpack.c.l.b16 %v335
        %v348 = vunpack.c.l.b16 %v336
        %v349 = vpack.c.b16 %v348, %v347
        %vm351 = vcmask 130048
        %v353 = vsel %vm351, %v343, 0
        %v356 = vsel %vm351, %v344, 0
        %358 = vmatpush.bf16.msra.mxu0 0
        %359 = vmatpush.bf16.msra.mxu0 0
        %360 = vmatpush.bf16.msra.mxu0 0
        %361 = vmatpush.bf16.msra.mxu0 0
        %362 = vmatpush.bf16.msra.mxu0 0
        %363 = vmatpush.bf16.msra.mxu0 0
        %364 = vmatpush.bf16.msra.mxu0 0
        %365 = vmatpush.bf16.msra.mxu0 %v349
        %366 = vmatmul.bf16.gmra.mxu0 %v353
        %v367 = vpop.f32.mrf.mxu0
        %v368 = vadd.f32 0.0, %v367
        %v369 = vpop.f32.mrf.mxu0
        %v370 = vadd.f32 0.0, %v369
        %371 = vmatmul.bf16.gmra.mxu0 %v356
        %v372 = vpop.f32.mrf.mxu0
        %v373 = vadd.f32 0.0, %v372
        %v374 = vpop.f32.mrf.mxu0
        %375 = vdwg.mxu0
        %p376 = scmp.eq.s32.totalorder %s25, 0
        // Predicated region
        $region49: #{tpu_custom_call.1} parent=47 // pred_check
          %p377 = pneg %p376
        $region50: #{tpu_custom_call.1} parent=47 // pred_check_branch
          %379 = sbr.rel (%p377) target = $region52
        $region51: #{tpu_custom_call.1} parent=47 // pred_region
          %p380 = scmp.eq.s32.totalorder %s26, 0
          // Predicated region
          $region53: #{tpu_custom_call.1} parent=51 // pred_check
            %p381 = pneg %p380
          $region54: #{tpu_custom_call.1} parent=51 // pred_check_branch
            %383 = sbr.rel (%p381) target = $region56
          $region55: #{tpu_custom_call.1} parent=51 // pred_region
            %vm384 = vcmask 261120
            %385 = vst.msk [vmem:[#allocation2] sm:$0xff] %vm384, 0.0
            %386 = vst.msk [vmem:[#allocation3] sm:$0xff] %vm384, 0.0
            %vm387 = vcmask 7168
            %388 = vst.msk [vmem:[#allocation4] sm:$0xff] %vm387, 0.0
          $region56: #{tpu_custom_call.1} parent=51 // pred_fallthru
            _
          %v389 = vld [vmem:[%s328] sm:$0x1]
          %v390 = vlaneseq
          %v391 = vshrl.u32 %v390, 7
          %v392 = vperm.slane %v389, 0
          %vm393 = vcmp.eq.s32.totalorder %v391, %v392
          %v394 = vsel %vm393, 1, 0
          %v395 = vcvt.s32.f32 %v394
          %v396 = vld [vmem:[#allocation2] sm:$0xff]
          %vm397 = vcmask 195584
          %v399 = vsel %vm397, %v395, 0
          %401 = vmatpush.msra.mxu0 0.0
          %402 = vmatpush.msra.mxu0 0.0
          %403 = vmatpush.msra.mxu0 0.0
          %404 = vmatpush.msra.mxu0 0.0
          %405 = vmatpush.msra.mxu0 0.0
          %406 = vmatpush.msra.mxu0 0.0
          %407 = vmatpush.msra.mxu0 0.0
          %408 = vmatpush.msra.mxu0 0.0
          %409 = vmatpush.msra.mxu0 0.0
          %410 = vmatpush.msra.mxu0 0.0
          %411 = vmatpush.msra.mxu0 0.0
          %412 = vmatpush.msra.mxu0 0.0
          %413 = vmatpush.msra.mxu0 0.0
          %414 = vmatpush.msra.mxu0 %v373
          %415 = vmatpush.msra.mxu0 %v370
          %416 = vmatpush.msra.mxu0 %v368
          %417 = vmatmul.f32.gmra.mxu0 %v399
          %v418 = vpop.f32.mrf.mxu0
          %v419 = vadd.f32 0.0, %v418
          %420 = vdwg.mxu0
          %v421 = vadd.f32 %v396, %v419
          %vm422 = vcmask 261120
          %423 = vst.msk [vmem:[#allocation2] sm:$0xff] %vm422, %v421
          %v424 = vld [vmem:[#allocation3] sm:$0xff]
          %v425 = vmul.f32 %v368, %v368
          %v426 = vmul.f32 %v370, %v370
          %v427 = vmul.f32 %v373, %v373
          %428 = vmatpush.msra.mxu0 0.0
          %429 = vmatpush.msra.mxu0 0.0
          %430 = vmatpush.msra.mxu0 0.0
          %431 = vmatpush.msra.mxu0 0.0
          %432 = vmatpush.msra.mxu0 0.0
          %433 = vmatpush.msra.mxu0 0.0
          %434 = vmatpush.msra.mxu0 0.0
          %435 = vmatpush.msra.mxu0 0.0
          %436 = vmatpush.msra.mxu0 0.0
          %437 = vmatpush.msra.mxu0 0.0
          %438 = vmatpush.msra.mxu0 0.0
          %439 = vmatpush.msra.mxu0 0.0
          %440 = vmatpush.msra.mxu0 0.0
          %441 = vmatpush.msra.mxu0 %v427
          %442 = vmatpush.msra.mxu0 %v426
          %443 = vmatpush.msra.mxu0 %v425
          %444 = vmatmul.f32.gmra.mxu0 %v399
          %v445 = vpop.f32.mrf.mxu0
          %v446 = vadd.f32 0.0, %v445
          %447 = vdwg.mxu0
          %v448 = vadd.f32 %v424, %v446
          %449 = vst.msk [vmem:[#allocation3] sm:$0xff] %vm422, %v448
          %v450 = vld [vmem:[#allocation4] sm:$0xff]
          %v451 = vsel %vm397, %v395, 0.0
          %452 = vadd.xlane.f32.xlu0 %v451
          %v453 = vpop.xlane.xlu0 %452
          %v454 = vadd.f32 %v450, %v453
          %vm455 = vcmask 7168
          %456 = vst.msk [vmem:[#allocation4] sm:$0xff] %vm455, %v454
        $region52: #{tpu_custom_call.1} parent=47 // pred_fallthru
          _
        %p457 = scmp.eq.s32.totalorder %s25, 1
        // Predicated region
        $region57: #{tpu_custom_call.1} parent=47 // pred_check
          %p458 = pneg %p457
        $region58: #{tpu_custom_call.1} parent=47 // pred_check_branch
          %460 = sbr.rel (%p458) target = $region60
        $region59: #{tpu_custom_call.1} parent=47 // pred_region
          %p461 = scmp.eq.s32.totalorder %s26, 0
          // Predicated region
          $region61: #{tpu_custom_call.1} parent=59 // pred_check
            %p462 = pneg %p461
          $region62: #{tpu_custom_call.1} parent=59 // pred_check_branch
            %464 = sbr.rel (%p462) target = $region64
          $region63: #{tpu_custom_call.1} parent=59 // pred_region
            %v465 = vld [vmem:[%s4] sm:$0xff]
            %v466 = vld [vmem:[%s4 + $0x8] sm:$0xff]
            %v467 = vld [vmem:[%s4 + $0x10] sm:$0xff]
            %v468 = vld [vmem:[%s4 + $0x18] sm:$0xff]
            %v469 = vld [vmem:[#allocation4] sm:$0xff]
            %v470 = vmul.f32 %v469, 4.0
            %v471 = vadd.f32 %v470, 1e-05
            %v472 = vrcp.pop %v471
            %v473 = vmul.f32 %v471, %v472
            %v474 = vsub.f32 1.0, %v473
            %v475 = vmul.f32 %v472, %v474
            %v476 = vadd.f32 %v472, %v475
            %vm477 = vweird.f32 %v471
            %vm478 = vweird.f32 %v472
            %vm479 = vmor %vm477, %vm478
            %v480 = vsel %vm479, %v472, %v476
            %v481 = vand.u32 2147483647, %v471
            %vm482 = vcmp.eq.f32.partialorder %v481, 8.507059e+37
            %v483 = vand.u32 %v471, 2147483648
            %v484 = vor.u32 1.1754944e-38, %v483
            %v485 = vsel %vm482, %v484, %v480
            %v486 = vmul.f32 1.0, %v485
            %v487 = vld [vmem:[#allocation2] sm:$0xff]
            %vm488 = vcmask 261120
            %v490 = vsel %vm488, %v487, 0
            %492 = vmatpush.msra.mxu0 0.0
            %493 = vmatpush.msra.mxu0 0.0
            %494 = vmatpush.msra.mxu0 0.0
            %495 = vmatpush.msra.mxu0 0.0
            %496 = vmatpush.msra.mxu0 0.0
            %497 = vmatpush.msra.mxu0 0.0
            %498 = vmatpush.msra.mxu0 0.0
            %499 = vmatpush.msra.mxu0 0.0
            %500 = vmatpush.msra.mxu0 0.0
            %501 = vmatpush.msra.mxu0 0.0
            %502 = vmatpush.msra.mxu0 0.0
            %503 = vmatpush.msra.mxu0 0.0
            %504 = vmatpush.msra.mxu0 %v468
            %505 = vmatpush.msra.mxu0 %v467
            %506 = vmatpush.msra.mxu0 %v466
            %507 = vmatpush.msra.mxu0 %v465
            %508 = vmatmul.f32.gmra.mxu0 %v490
            %v509 = vpop.f32.mrf.mxu0
            %v510 = vadd.f32 0.0, %v509
            %511 = vdwg.mxu0
            %v512 = vld [vmem:[#allocation3] sm:$0xff]
            %v514 = vsel %vm488, %v512, 0
            %516 = vmatpush.msra.mxu0 0.0
            %517 = vmatpush.msra.mxu0 0.0
            %518 = vmatpush.msra.mxu0 0.0
            %519 = vmatpush.msra.mxu0 0.0
            %520 = vmatpush.msra.mxu0 0.0
            %521 = vmatpush.msra.mxu0 0.0
            %522 = vmatpush.msra.mxu0 0.0
            %523 = vmatpush.msra.mxu0 0.0
            %524 = vmatpush.msra.mxu0 0.0
            %525 = vmatpush.msra.mxu0 0.0
            %526 = vmatpush.msra.mxu0 0.0
            %527 = vmatpush.msra.mxu0 0.0
            %528 = vmatpush.msra.mxu0 %v468
            %529 = vmatpush.msra.mxu0 %v467
            %530 = vmatpush.msra.mxu0 %v466
            %531 = vmatpush.msra.mxu0 %v465
            %532 = vmatmul.f32.gmra.mxu0 %v514
            %v533 = vpop.f32.mrf.mxu0
            %v534 = vadd.f32 0.0, %v533
            %535 = vdwg.mxu0
            %537 = vset.pattern.permute.xlu0 0
            %538 = vperm.xlu0 %537, %v486
            %v539 = vpop.permute.xlu0 %538
            %v541 = vmul.f32 %v510, %v539
            %v542 = vmul.f32 %v541, %v510
            %v543 = vmul.f32 %v470, %v486
            %v544 = vsub.f32 2.0, %v543
            %546 = vset.pattern.permute.xlu0 0
            %547 = vperm.xlu0 %546, %v544
            %v548 = vpop.permute.xlu0 %547
            %v550 = vmul.f32 %v542, %v548
            %v551 = vsub.f32 %v534, %v550
            %v552 = vmul.f32 %v551, %v539
            %v553 = vadd.f32 %v552, 1e-05
            %v554 = vrsqrt.pop %v553
            %v555 = vmul.f32 %v554, %v553
            %v556 = vmul.f32 %v555, %v554
            %v557 = vmul.f32 0.5, %v556
            %v558 = vsub.f32 1.5, %v557
            %v559 = vmul.f32 %v554, %v558
            %v560 = vmul.f32 %v553, %v559
            %vm561 = vcmp.eq.f32.partialorder %v553, inf
            %v562 = vsel %vm561, %v553, %v560
            %vm563 = vcmp.eq.f32.partialorder %v553, 0.0
            %v564 = vand.u32 %v553, 2147483648
            %v565 = vsel %vm563, %v564, %v562
            %v566 = vrcp.pop %v565
            %v567 = vmul.f32 %v565, %v566
            %v568 = vsub.f32 1.0, %v567
            %v569 = vmul.f32 %v566, %v568
            %v570 = vadd.f32 %v566, %v569
            %vm571 = vweird.f32 %v565
            %vm572 = vweird.f32 %v566
            %vm573 = vmor %vm571, %vm572
            %v574 = vsel %vm573, %v566, %v570
            %v575 = vand.u32 2147483647, %v565
            %vm576 = vcmp.eq.f32.partialorder %v575, 8.507059e+37
            %v577 = vand.u32 %v565, 2147483648
            %v578 = vor.u32 1.1754944e-38, %v577
            %v579 = vsel %vm576, %v578, %v574
            %v580 = vmul.f32 1.0, %v579
            %v581 = vld [vmem:[%s5] sm:$0x1]
            %v583 = vperm.slane %v581, 0
            %v585 = vmul.f32 %v580, %v583
            %586 = vst.msk [vmem:[#allocation5] sm:$0xff] %vm488, %v585
            %v587 = vld [vmem:[%s6] sm:$0x1]
            %v588 = vmul.f32 %v541, %v585
            %v590 = vperm.slane %v587, 0
            %v592 = vsub.f32 %v590, %v588
            %593 = vst.msk [vmem:[#allocation6] sm:$0xff] %vm488, %v592
          $region64: #{tpu_custom_call.1} parent=59 // pred_fallthru
            _
          %v594 = vld [vmem:[%s324] sm:$0xff]
          %v595 = vld [vmem:[%s324 + $0x8] sm:$0xff]
          %v596 = vld [vmem:[%s324 + $0x10] sm:$0xff]
          %v597 = vlaneseq
          %v598 = vand.u32 %v597, 127
          %599 = vset.pattern.permute.xlu0 0
          %600 = vperm.xlu0 %599, %v594
          %v601 = vpop.permute.xlu0 %600
          %602 = vset.pattern.permute.xlu0 0
          %603 = vperm.xlu0 %602, %v595
          %v604 = vpop.permute.xlu0 %603
          %605 = vset.pattern.permute.xlu0 0
          %606 = vperm.xlu0 %605, %v596
          %v607 = vpop.permute.xlu0 %606
          %vm608 = vcmp.eq.s32.totalorder %v601, %v598
          %vm609 = vcmp.eq.s32.totalorder %v604, %v598
          %vm610 = vcmp.eq.s32.totalorder %v607, %v598
          %v611 = vsel %vm608, 1, 0
          %v612 = vsel %vm609, 1, 0
          %v613 = vsel %vm610, 1, 0
          %v614 = vcvt.s32.f32 %v611
          %v615 = vcvt.s32.f32 %v612
          %v616 = vcvt.s32.f32 %v613
          %v617 = vld [vmem:[#allocation5] sm:$0xff]
          %vm618 = vcmask 64512
          %v620 = vsel %vm618, %v614, 0
          %v623 = vsel %vm618, %v615, 0
          %v626 = vsel %vm618, %v616, 0
          %628 = vmatpush.msra.mxu0 0.0
          %629 = vmatpush.msra.mxu0 0.0
          %630 = vmatpush.msra.mxu0 0.0
          %631 = vmatpush.msra.mxu0 0.0
          %632 = vmatpush.msra.mxu0 0.0
          %633 = vmatpush.msra.mxu0 0.0
          %634 = vmatpush.msra.mxu0 0.0
          %635 = vmatpush.msra.mxu0 0.0
          %636 = vmatpush.msra.mxu0 0.0
          %637 = vmatpush.msra.mxu0 0.0
          %638 = vmatpush.msra.mxu0 0.0
          %639 = vmatpush.msra.mxu0 0.0
          %640 = vmatpush.msra.mxu0 0.0
          %641 = vmatpush.msra.mxu0 0.0
          %642 = vmatpush.msra.mxu0 0.0
          %643 = vmatpush.msra.mxu0 %v617
          %644 = vmatmul.f32.gmra.mxu0 %v620
          %v645 = vpop.f32.mrf.mxu0
          %v646 = vadd.f32 0.0, %v645
          %647 = vmatmul.f32.gmra.mxu0 %v623
          %v648 = vpop.f32.mrf.mxu0
          %v649 = vadd.f32 0.0, %v648
          %650 = vmatmul.f32.gmra.mxu0 %v626
          %v651 = vpop.f32.mrf.mxu0
          %v652 = vadd.f32 0.0, %v651
          %653 = vdwg.mxu0
          %v654 = vld [vmem:[#allocation6] sm:$0xff]
          %655 = vmatpush.msra.mxu0 0.0
          %656 = vmatpush.msra.mxu0 0.0
          %657 = vmatpush.msra.mxu0 0.0
          %658 = vmatpush.msra.mxu0 0.0
          %659 = vmatpush.msra.mxu0 0.0
          %660 = vmatpush.msra.mxu0 0.0
          %661 = vmatpush.msra.mxu0 0.0
          %662 = vmatpush.msra.mxu0 0.0
          %663 = vmatpush.msra.mxu0 0.0
          %664 = vmatpush.msra.mxu0 0.0
          %665 = vmatpush.msra.mxu0 0.0
          %666 = vmatpush.msra.mxu0 0.0
          %667 = vmatpush.msra.mxu0 0.0
          %668 = vmatpush.msra.mxu0 0.0
          %669 = vmatpush.msra.mxu0 0.0
          %670 = vmatpush.msra.mxu0 %v654
          %671 = vmatmul.f32.gmra.mxu0 %v620
          %v672 = vpop.f32.mrf.mxu0
          %v673 = vadd.f32 0.0, %v672
          %674 = vmatmul.f32.gmra.mxu0 %v623
          %v675 = vpop.f32.mrf.mxu0
          %v676 = vadd.f32 0.0, %v675
          %677 = vmatmul.f32.gmra.mxu0 %v626
          %v678 = vpop.f32.mrf.mxu0
          %v679 = vadd.f32 0.0, %v678
          %680 = vdwg.mxu0
          %v681 = vmul.f32 %v368, %v646
          %v682 = vmul.f32 %v370, %v649
          %v683 = vmul.f32 %v373, %v652
          %v684 = vadd.f32 %v681, %v673
          %v685 = vadd.f32 %v682, %v676
          %v686 = vadd.f32 %v683, %v679
          %v687 = vmul.f32 %v684, 0.70710677
          %v688 = vmul.f32 %v685, 0.70710677
          %v689 = vmul.f32 %v686, 0.70710677
          %v690 = vand.u32 2147483647, %v687
          %v691 = vand.u32 2147483647, %v688
          %v692 = vand.u32 2147483647, %v689
          %v693 = vmul.f32 %v690, 0.3275911
          %v694 = vmul.f32 %v691, 0.3275911
          %v695 = vmul.f32 %v692, 0.3275911
          %v696 = vadd.f32 %v693, 1.0
          %v697 = vadd.f32 %v694, 1.0
          %v698 = vadd.f32 %v695, 1.0
          %v699 = vrcp.pop %v696
          %v700 = vrcp.pop %v697
          %v701 = vrcp.pop %v698
          %v702 = vmul.f32 %v696, %v699
          %v703 = vmul.f32 %v697, %v700
          %v704 = vmul.f32 %v698, %v701
          %v705 = vsub.f32 2.0, %v702
          %v706 = vsub.f32 2.0, %v703
          %v707 = vsub.f32 2.0, %v704
          %v708 = vmul.f32 %v699, %v705
          %v709 = vmul.f32 %v700, %v706
          %v710 = vmul.f32 %v701, %v707
          %v711 = vmul.f32 %v708, 1.0614054
          %v712 = vmul.f32 %v709, 1.0614054
          %v713 = vmul.f32 %v710, 1.0614054
          %v714 = vadd.f32 %v711, -1.4531521
          %v715 = vadd.f32 %v712, -1.4531521
          %v716 = vadd.f32 %v713, -1.4531521
          %v717 = vmul.f32 %v708, %v714
          %v718 = vmul.f32 %v709, %v715
          %v719 = vmul.f32 %v710, %v716
          %v720 = vadd.f32 %v717, 1.4214138
          %v721 = vadd.f32 %v718, 1.4214138
          %v722 = vadd.f32 %v719, 1.4214138
          %v723 = vmul.f32 %v708, %v720
          %v724 = vmul.f32 %v709, %v721
          %v725 = vmul.f32 %v710, %v722
          %v726 = vadd.f32 %v723, -0.28449672
          %v727 = vadd.f32 %v724, -0.28449672
          %v728 = vadd.f32 %v725, -0.28449672
          %v729 = vmul.f32 %v708, %v726
          %v730 = vmul.f32 %v709, %v727
          %v731 = vmul.f32 %v710, %v728
          %v732 = vadd.f32 %v729, 0.2548296
          %v733 = vadd.f32 %v730, 0.2548296
          %v734 = vadd.f32 %v731, 0.2548296
          %v735 = vmul.f32 %v708, %v732
          %v736 = vmul.f32 %v709, %v733
          %v737 = vmul.f32 %v710, %v734
          %v738 = vsub.f32 0.0, %v690
          %v739 = vsub.f32 0.0, %v691
          %v740 = vsub.f32 0.0, %v692
          %v741 = vmul.f32 %v738, %v690
          %v742 = vmul.f32 %v739, %v691
          %v743 = vmul.f32 %v740, %v692
          %v744 = vmul.f32 %v741, 1.442695
          %v745 = vpow.pop %v744
          %v746 = vmul.f32 %v742, 1.442695
          %v747 = vpow.pop %v746
          %v748 = vmul.f32 %v743, 1.442695
          %v749 = vpow.pop %v748
          %v750 = vmul.f32 %v735, %v745
          %v751 = vmul.f32 %v736, %v747
          %v752 = vmul.f32 %v737, %v749
          %v753 = vsub.f32 1.0, %v750
          %v754 = vsub.f32 1.0, %v751
          %v755 = vsub.f32 1.0, %v752
          %vm756 = vcmp.lt.f32.partialorder %v687, 0.0
          %vm757 = vcmp.lt.f32.partialorder %v688, 0.0
          %vm758 = vcmp.lt.f32.partialorder %v689, 0.0
          %v759 = vsub.f32 0.0, %v753
          %v760 = vsub.f32 0.0, %v754
          %v761 = vsub.f32 0.0, %v755
          %v762 = vsel %vm756, %v759, %v753
          %v763 = vsel %vm757, %v760, %v754
          %v764 = vsel %vm758, %v761, %v755
          %v765 = vmul.f32 %v684, 0.5
          %v766 = vmul.f32 %v685, 0.5
          %v767 = vmul.f32 %v686, 0.5
          %v768 = vadd.f32 %v762, 1.0
          %v769 = vadd.f32 %v763, 1.0
          %v770 = vadd.f32 %v764, 1.0
          %v771 = vmul.f32 %v765, %v768
          %v772 = vmul.f32 %v766, %v769
          %v773 = vmul.f32 %v767, %v770
          %vm774 = vcmask 261120
          %775 = vst.msk [vmem:[%s313] sm:$0xff] %vm774, %v771
          %776 = vst.msk [vmem:[%s313 + $0x8] sm:$0xff] %vm774, %v772
          %777 = vst.msk [vmem:[%s313 + $0x10] sm:$0xff] %vm774, %v773
        $region60: #{tpu_custom_call.1} parent=47 // pred_fallthru
          _
        %s778 = sand.u32 %s205, 1
        %s779 = scalar_lea.sflag [#allocation8], %s778
        %s780 = sand.u32 %s205, 1
        %s781 = smul.addr %s780, 24
        %s782 = scalar_lea.vmem [#allocation7], %s781
        // Predicated region
        $region65: #{tpu_custom_call.1} parent=47 // pred_check
          %p783 = pneg %p215
        $region66: #{tpu_custom_call.1} parent=47 // pred_check_branch
          %785 = sbr.rel (%p783) target = $region68
        $region67: #{tpu_custom_call.1} parent=47 // pred_region
          %s786 = smul.u32 %s25, %s26
          %s787 = smul.u32 3, %s786
          %789 = vsyncadd %s779, 0
          %s790 = smul.addr %s787, 8
          %s791 = scalar_lea.hbm %s7, %s790
          %s792 = sshll.u32 %s782, 4
          %s793 = int_to_ptr.vmem [resolvable:$true] %s792
          %s794 = sshll.u32 %s791, 4
          %s795 = int_to_ptr.hbm [resolvable:$true] %s794
          %800 = dma.vmem_to_hbm [thread:$0]  %s793, 384, %s795, %s779, 128, 128, 8
        $region68: #{tpu_custom_call.1} parent=47 // pred_fallthru
          _
      $region48: #{tpu_custom_call.1} parent=5 // pred_fallthru
        _
      %p801 = scmp.le.s32.totalorder 2, %s16
      // Predicated region
      $region69: #{tpu_custom_call.1} parent=5 // pred_check
        %p802 = pneg %p801
      $region70: #{tpu_custom_call.1} parent=5 // pred_check_branch
        %804 = sbr.rel (%p802) target = $region72
      $region71: #{tpu_custom_call.1} parent=5 // pred_region
        %s805 = ssub.s32 %s16, 2
        // Predicated region
        $region73: #{tpu_custom_call.1} parent=71 // pred_check
          %p806 = pneg %p221
        $region74: #{tpu_custom_call.1} parent=71 // pred_check_branch
          %808 = sbr.rel (%p806) target = $region76
        $region75: #{tpu_custom_call.1} parent=71 // pred_region
          %s809 = sand.u32 %s206, 1
          %s810 = scalar_lea.sflag [#allocation8], %s809
          %s811 = sand.u32 %s206, 1
          %s812 = smul.addr %s811, 24
          %s813 = scalar_lea.vmem [#allocation7], %s812
          %815 = dma.done %s810, 384
        $region76: #{tpu_custom_call.1} parent=71 // pred_fallthru
          _
      $region72: #{tpu_custom_call.1} parent=5 // pred_fallthru
        _
    $region6: #{tpu_custom_call.1} parent=1 // loop_footer
      %s20 = sadd.s32 1, %s16
    $region7: #{tpu_custom_call.1} parent=1 // loop_footer_branch
      %15 = sbr.rel target = $region3
    $region8: #{tpu_custom_call.1} parent=1 // loop_exit
      _
    %816 = vsyncpa [#allocation8], 1
    %s817 = scalar_lea.sflag [#allocation8], 1
    %818 = vsyncpa %s817, 1

</llo_original>
